<compile_context>
chip_gen: v7x
topology: tpu7x:2x2x1
jax: 0.10.0
libtpu: 0.0.40
codegen_flags: <defaults>
</compile_context>

<pallas_src>
import jax
import jax.numpy as jnp
from jax import lax
from jax.experimental import pallas as pl
from jax.experimental.pallas import tpu as pltpu


def _pick_tile(dim, preferred, align):
    """Largest tile <= preferred that divides dim and is a multiple of align
    (falls back to the full dim, which always satisfies the layout rules)."""
    if dim <= preferred:
        return dim
    t = (preferred // align) * align
    while t >= align:
        if dim % t == 0:
            return t
        t -= align
    return dim


# ----------------------------------------------------------------------------
# Kernel 1: fused input projection  x_t @ W_ih[H,4H] + (b_ih + b_hh)
#           (off the serial critical path; pipelined over (P tiles, L))
# ----------------------------------------------------------------------------
def _input_proj_kernel(xg_ref, wih_ref, b_ref, o_ref):
    xg = xg_ref[0]                                        # [TP, H] (compute dtype)
    proj = jnp.dot(xg, wih_ref[...], preferred_element_type=jnp.float32)
    o_ref[0] = (proj + b_ref[...]).astype(o_ref.dtype)    # [TP, 4H] f32


def lstm_input_projection(x_seq, w_ih, b):
    """x_seq: [L, P, H] time-major (compute dtype). Returns x_proj: [L, P, 4H] f32."""
    L, P, H = x_seq.shape
    G = w_ih.shape[1]                                     # 4H
    tp = _pick_tile(P, 256, 8)
    return pl.pallas_call(
        _input_proj_kernel,
        out_shape=jax.ShapeDtypeStruct((L, P, G), jnp.float32),
        grid_spec=pltpu.PrefetchScalarGridSpec(
            num_scalar_prefetch=0,
            grid=(P // tp, L),
            in_specs=[
                pl.BlockSpec((1, tp, H), lambda p, t: (t, p, 0)),
                pl.BlockSpec((H, G), lambda p, t: (0, 0)),
                pl.BlockSpec((1, G), lambda p, t: (0, 0)),
            ],
            out_specs=pl.BlockSpec((1, tp, G), lambda p, t: (t, p, 0)),
        ),
        compiler_params=pltpu.CompilerParams(
            dimension_semantics=("parallel", "parallel")),
    )(x_seq, w_ih, b)


# ----------------------------------------------------------------------------
# Kernel 2: sequential LSTM recurrence (fused gates, only h @ W_hh on the
#           critical path).  grid = (P tiles, L); P tiles shard across cores.
# ----------------------------------------------------------------------------
def _lstm_recur_kernel(xp_ref, whh_ref, o_ref, h_sc, c_sc):
    t = pl.program_id(1)
    H = whh_ref.shape[0]

    @pl.when(t == 0)
    def _():
        h_sc[...] = jnp.zeros_like(h_sc)
        c_sc[...] = jnp.zeros_like(c_sc)

    h_prev = h_sc[...]                                    # [TP, H] f32
    c_prev = c_sc[...]

    # fused gate slab: [TP, 4H] = x_proj_t + h_prev @ W_hh_fused
    gates = xp_ref[0] + jnp.dot(h_prev.astype(whh_ref.dtype), whh_ref[...],
                                preferred_element_type=jnp.float32)

    i_g = jax.nn.sigmoid(gates[:, 0:H])                   # PyTorch gate order i,f,g,o
    f_g = jax.nn.sigmoid(gates[:, H:2 * H])
    g_g = jnp.tanh(gates[:, 2 * H:3 * H])
    o_g = jax.nn.sigmoid(gates[:, 3 * H:4 * H])

    c_new = f_g * c_prev + i_g * g_g
    h_new = o_g * jnp.tanh(c_new)

    c_sc[...] = c_new
    h_sc[...] = h_new

    @pl.when(t == pl.num_programs(1) - 1)
    def _():
        o_ref[...] = h_new.astype(o_ref.dtype)


def lstm_recurrence(x_proj, w_hh):
    """x_proj: [L, P, 4H] f32, w_hh: [H, 4H] (compute dtype). Returns h_n: [P, H] f32."""
    L, P, G = x_proj.shape
    H = w_hh.shape[0]
    tp = _pick_tile(P, 256, 8)
    return pl.pallas_call(
        _lstm_recur_kernel,
        out_shape=jax.ShapeDtypeStruct((P, H), jnp.float32),
        grid_spec=pltpu.PrefetchScalarGridSpec(
            num_scalar_prefetch=0,
            grid=(P // tp, L),
            in_specs=[
                pl.BlockSpec((1, tp, G), lambda p, t: (t, p, 0)),
                pl.BlockSpec((H, G), lambda p, t: (0, 0)),
            ],
            out_specs=pl.BlockSpec((tp, H), lambda p, t: (p, 0)),
            scratch_shapes=[
                pltpu.VMEM((tp, H), jnp.float32),          # h state
                pltpu.VMEM((tp, H), jnp.float32),          # c state
            ],
        ),
        compiler_params=pltpu.CompilerParams(
            dimension_semantics=("parallel", "arbitrary")),
    )(x_proj, w_hh)


# ----------------------------------------------------------------------------
# Kernel 3: tiled scatter_add (per-tile one-hot matmul) + residual
#           grid = (N tiles, P tiles); P is the reduction axis, output is resident.
# ----------------------------------------------------------------------------
def _scatter_residual_kernel(idx_ref, h_ref, x_ref, o_ref):
    i = pl.program_id(0)
    j = pl.program_id(1)
    TN = x_ref.shape[0]
    TP = h_ref.shape[0]

    @pl.when(j == 0)
    def _():
        o_ref[...] = x_ref[...]                            # residual init

    # per-tile one-hot: onehot[n, p] = (global_row(n) == paths[p_tile, -1])
    rows = i * TN + lax.broadcasted_iota(jnp.int32, (TN, TP), 0)
    onehot = (rows == idx_ref[...]).astype(jnp.float32)    # idx_ref: [1, TP] broadcasts
    o_ref[...] += jnp.dot(onehot, h_ref[...],
                          preferred_element_type=jnp.float32)


def scatter_add_residual(last_idx, h_n, x):
    """last_idx: [1, P] int32, h_n: [P, H] f32, x: [N, H] f32 -> s: [N, H] f32."""
    N, H = x.shape
    P = h_n.shape[0]
    tn = _pick_tile(N, 256, 8)
    tp = _pick_tile(P, 512, 128)
    return pl.pallas_call(
        _scatter_residual_kernel,
        out_shape=jax.ShapeDtypeStruct((N, H), jnp.float32),
        grid_spec=pltpu.PrefetchScalarGridSpec(
            num_scalar_prefetch=0,
            grid=(N // tn, P // tp),
            in_specs=[
                pl.BlockSpec((1, tp), lambda i, j: (0, j)),
                pl.BlockSpec((tp, H), lambda i, j: (j, 0)),
                pl.BlockSpec((tn, H), lambda i, j: (i, 0)),
            ],
            out_specs=pl.BlockSpec((tn, H), lambda i, j: (i, 0)),
        ),
        compiler_params=pltpu.CompilerParams(
            dimension_semantics=("parallel", "arbitrary")),
    )(last_idx, h_n, x)


# ----------------------------------------------------------------------------
# Kernel 4: BatchNorm1d normalize (batch stats, biased var) + affine + ReLU
# ----------------------------------------------------------------------------
def _bn_relu_kernel(s_ref, mean_ref, var_ref, gamma_ref, beta_ref, o_ref):
    inv = lax.rsqrt(var_ref[...] + 1e-5)
    y = (s_ref[...] - mean_ref[...]) * inv * gamma_ref[...] + beta_ref[...]
    o_ref[...] = jnp.maximum(y, 0.0)


def bn_relu(s, mean, var, gamma, beta):
    N, H = s.shape
    tn = _pick_tile(N, 512, 8)
    return pl.pallas_call(
        _bn_relu_kernel,
        out_shape=jax.ShapeDtypeStruct((N, H), jnp.float32),
        grid_spec=pltpu.PrefetchScalarGridSpec(
            num_scalar_prefetch=0,
            grid=(N // tn,),
            in_specs=[
                pl.BlockSpec((tn, H), lambda i: (i, 0)),
                pl.BlockSpec((1, H), lambda i: (0, 0)),
                pl.BlockSpec((1, H), lambda i: (0, 0)),
                pl.BlockSpec((1, H), lambda i: (0, 0)),
                pl.BlockSpec((1, H), lambda i: (0, 0)),
            ],
            out_specs=pl.BlockSpec((tn, H), lambda i: (i, 0)),
        ),
        compiler_params=pltpu.CompilerParams(
            dimension_semantics=("parallel",)),
    )(s, mean, var, gamma, beta)


# ----------------------------------------------------------------------------
# PathConv forward wrapper
# ----------------------------------------------------------------------------
def path_conv_forward(x, paths, params, *, compute_dtype=jnp.bfloat16):
    """
    x:      [N, H] float32 node features
    paths:  [P, L] int32 path node indices
    params: dict with fused-gate layout:
            'w_ih' [H, 4H], 'w_hh' [H, 4H], 'b' [1, 4H] (= b_ih + b_hh),
            'gamma' [1, H], 'beta' [1, H]
    compute_dtype: MXU operand dtype (bf16 on v6e/v7x/v5e; accumulation,
                   h/c state and gate nonlinearities stay f32).
    """
    N, H = x.shape
    P, L = paths.shape

    # Gather directly in time-major order [L, P, H]; dropout (p=0 / eval) is identity.
    gathered = x[paths.T].astype(compute_dtype)
    w_ih = params["w_ih"].astype(compute_dtype)
    w_hh = params["w_hh"].astype(compute_dtype)

    x_proj = lstm_input_projection(gathered, w_ih, params["b"])   # [L, P, 4H] f32
    h_n = lstm_recurrence(x_proj, w_hh)                           # [P, H]    f32

    last_idx = paths[:, -1].astype(jnp.int32).reshape(1, P)       # [1, P]
    s = scatter_add_residual(last_idx, h_n, x)                    # [N, H]

    # BatchNorm1d training-mode batch statistics (biased variance): tiny [H]
    # reduction done in JAX glue; normalization + affine + ReLU in the kernel.
    mean = jnp.mean(s, axis=0, keepdims=True)
    var = jnp.mean((s - mean) ** 2, axis=0, keepdims=True)
    return bn_relu(s, mean, var, params["gamma"], params["beta"])


def init_params(key, hidden_dim):
    k1, k2, k3, k4 = jax.random.split(key, 4)
    scale = 1.0 / jnp.sqrt(hidden_dim)
    G = 4 * hidden_dim
    # fused-gate layout [H, 4H], gate order i, f, g, o along the 4H dim
    w_ih = jax.random.uniform(k1, (hidden_dim, G), jnp.float32, -scale, scale)
    w_hh = jax.random.uniform(k2, (hidden_dim, G), jnp.float32, -scale, scale)
    b_ih = jax.random.uniform(k3, (1, G), jnp.float32, -scale, scale)
    b_hh = jax.random.uniform(k4, (1, G), jnp.float32, -scale, scale)
    b = b_ih + b_hh                       # nn.LSTM has two biases; pre-sum them
    gamma = jnp.ones((1, hidden_dim), jnp.float32)   # BatchNorm1d.reset_parameters
    beta = jnp.zeros((1, hidden_dim), jnp.float32)
    return {"w_ih": w_ih, "w_hh": w_hh, "b": b, "gamma": gamma, "beta": beta}


if __name__ == "__main__":
    N, H = 16, 32      # num nodes, hidden_dim  (4H = 128 -> lane-dense gate slab)
    P, L = 8, 4        # num paths, path length

    key = jax.random.PRNGKey(0)
    kx, kp, kw = jax.random.split(key, 3)
    x = jax.random.normal(kx, (N, H), jnp.float32)
    paths = jax.random.randint(kp, (P, L), 0, N, jnp.int32)
    params = init_params(kw, H)

    out = path_conv_forward(x, paths, params)
    jax.block_until_ready(out)
    assert out.shape == (N, H)
    print("KERNEL_OK")
</pallas_src>

<mosaic_0001>
module attributes {stable_mosaic.version = 11 : i64} {
  func.func @_input_proj_kernel(%arg0: i32, %arg1: i32, %arg2: memref<1x8x32xbf16, #tpu.memory_space<vmem>>, %arg3: memref<32x128xbf16, #tpu.memory_space<vmem>>, %arg4: memref<1x128xf32, #tpu.memory_space<vmem>>, %arg5: memref<1x8x128xf32, #tpu.memory_space<vmem>>) attributes {dimension_semantics = [#tpu.dimension_semantics<parallel>, #tpu.dimension_semantics<parallel>], iteration_bounds = array<i64: 1, 4>, scalar_prefetch = 0 : i64, scratch_operands = 0 : i64, tpu.core_type = #tpu.core_type<tc>, window_params = [{transform_indices = @transform_0, window_bounds = array<i64: 1, 8, 32>}, {pipeline_mode = #tpu.pipeline_mode<synchronous>, transform_indices = @transform_1, window_bounds = array<i64: 32, 128>}, {pipeline_mode = #tpu.pipeline_mode<synchronous>, transform_indices = @transform_2, window_bounds = array<i64: 1, 128>}, {transform_indices = @transform_3, window_bounds = array<i64: 1, 8, 128>}]} {
    %c0 = arith.constant 0 : index
    %c0_0 = arith.constant 0 : index
    %c0_1 = arith.constant 0 : index
    %0 = vector.load %arg2[%c0, %c0_0, %c0_1] : memref<1x8x32xbf16, #tpu.memory_space<vmem>>, vector<1x8x32xbf16>
    %1 = vector.shape_cast %0 : vector<1x8x32xbf16> to vector<8x32xbf16>
    %c0_2 = arith.constant 0 : index
    %c0_3 = arith.constant 0 : index
    %2 = vector.load %arg3[%c0_2, %c0_3] : memref<32x128xbf16, #tpu.memory_space<vmem>>, vector<32x128xbf16>
    %cst = arith.constant dense<0.000000e+00> : vector<8x128xf32>
    %3 = tpu.matmul %1, %2, %cst {dimension_numbers = #tpu.dot_dimension_numbers<[1], [0], [0], [1], [0, 0, 1, 1], [], []>} : vector<8x32xbf16>, vector<32x128xbf16>, vector<8x128xf32> -> vector<8x128xf32>
    %c0_4 = arith.constant 0 : index
    %c0_5 = arith.constant 0 : index
    %4 = vector.load %arg4[%c0_4, %c0_5] : memref<1x128xf32, #tpu.memory_space<vmem>>, vector<1x128xf32>
    %5 = vector.broadcast %4 : vector<1x128xf32> to vector<8x128xf32>
    %6 = arith.addf %3, %5 : vector<8x128xf32>
    %c0_6 = arith.constant 0 : index
    %c0_7 = arith.constant 0 : index
    %c0_8 = arith.constant 0 : index
    %7 = vector.load %arg5[%c0_6, %c0_7, %c0_8] : memref<1x8x128xf32, #tpu.memory_space<vmem>>, vector<1x8x128xf32>
    %8 = vector.shape_cast %7 : vector<1x8x128xf32> to vector<8x128xf32>
    %9 = vector.shape_cast %6 : vector<8x128xf32> to vector<1x8x128xf32>
    tpu.vector_store %arg5[%c0_6, %c0_7, %c0_8], %9 {strides = array<i32>} : memref<1x8x128xf32, #tpu.memory_space<vmem>>, vector<1x8x128xf32>,
    return
  }
  func.func @transform_0(%arg0: i32, %arg1: i32) -> (i32, i32, i32) {
    %c0_i32 = arith.constant 0 : i32
    %c0_i32_0 = arith.constant 0 : i32
    return %arg1, %arg0, %c0_i32 : i32, i32, i32
  }
  func.func @transform_1(%arg0: i32, %arg1: i32) -> (i32, i32) {
    %c0_i32 = arith.constant 0 : i32
    %c0_i32_0 = arith.constant 0 : i32
    %c0_i32_1 = arith.constant 0 : i32
    return %c0_i32, %c0_i32_0 : i32, i32
  }
  func.func @transform_2(%arg0: i32, %arg1: i32) -> (i32, i32) {
    %c0_i32 = arith.constant 0 : i32
    %c0_i32_0 = arith.constant 0 : i32
    %c0_i32_1 = arith.constant 0 : i32
    return %c0_i32, %c0_i32_0 : i32, i32
  }
  func.func @transform_3(%arg0: i32, %arg1: i32) -> (i32, i32, i32) {
    %c0_i32 = arith.constant 0 : i32
    %c0_i32_0 = arith.constant 0 : i32
    return %arg1, %arg0, %c0_i32 : i32, i32, i32
  }
}

</mosaic_0001>

<llo_original>
// kernel: tpu_custom_call.1
$region0: #{tpu_custom_call.1}
  #allocation0 [shape = 'u32[]', space=smem, size = 0x4, offset = 0x4, fixed_abs, tag = 'smem constant byte address 0x4 - core index']
  #allocation1 [shape = 'u32[144,128]{1,0:T(1,128)}', space=vmem, size = 0x12000, scoped, tag = 'internal scratch']
  %s0 = inlined_call_operand.hbm [shape: bf16[4,8,32], index: 0, kind: input, shape index: {}]
  %s1 = inlined_call_operand.hbm [shape: bf16[32,128], index: 1, kind: input, shape index: {}]
  %s2 = inlined_call_operand.vmem [shape: f32[1,128], index: 2, kind: input, shape index: {}]
  %s3 = inlined_call_operand.hbm [shape: f32[4,8,128], index: 3, kind: output, shape index: {}]
  %s4 = sld [smem:[#allocation0]]
  $region53: #{tpu_custom_call.1} parent=0
    _
  %s6 = ssub.s32 1, %s4
  %s7 = scalar_select 0, %s6, %s4
  $region1: #{tpu_custom_call.1} parent=0
    #allocation2 [shape = 'u8[4096]{0}', space=vmem, size = 0x1000, scoped, tag = 'input window, operand 0']
    #allocation3 [shape = 's32[2]{0}', space=sflag, size = 0x8, scoped, tag = 'scoped memory for tpu_custom_call.1']
    #allocation4 [shape = 's32[2]{0}', space=sflag, size = 0x8, scoped, tag = 'scoped memory for tpu_custom_call.1']
    #allocation5 [shape = 'u8[8192]{0}', space=vmem, size = 0x2000, scoped, tag = 'input window, operand 1, single buffered']
    #allocation6 [shape = 's32[1]{0}', space=sflag, size = 0x4, scoped, tag = 'scoped memory for tpu_custom_call.1']
    #allocation7 [shape = 'u8[8192]{0}', space=vmem, size = 0x2000, scoped, tag = 'output window, operand 0']
    %8 = vsyncpa [#allocation3], 0
    %s9 = scalar_lea.sflag [#allocation3], 1
    %10 = vsyncpa %s9, 0
    %11 = vsyncpa [#allocation6], 0
    %12 = vsyncpa [#allocation4], 0
    %s13 = scalar_lea.sflag [#allocation4], 1
    %14 = vsyncpa %s13, 0
    loop: start=0, step=1, limit=6
    $region2: #{tpu_custom_call.1} parent=1 // loop_pre_header
      _
    $region3: #{tpu_custom_call.1} parent=1 // loop_header
      %s16 = sphi 0, %s20
      %p17 = scmp.ge.s32.totalorder %s16, 6
      %s23 = sphi 0, %s35
      %s24 = sphi 0, %s31
      %s25 = sphi 0, %s23
      %s26 = sphi 0, %s24
      %s27 = sphi 0, %s25
      %s28 = sphi 0, %s26
      %s40 = sphi 0, %s42
      %s43 = sphi 0, %s40
      %s44 = sphi 0, %s43
      %s60 = sphi 0, %s44
      %s64 = sphi 0, %s64
      %s66 = sphi 0, %s64
      %s67 = sphi 0, %s66
      %s81 = sphi 0, %s67
      %s85 = sphi 0, %s85
      %s87 = sphi 0, %s85
      %s88 = sphi 0, %s87
      %s102 = sphi 0, %s88
      %s110 = sphi 0, %s112
      %s113 = sphi 0, %s110
      %s114 = sphi 0, %s113
      %s130 = sphi 0, %s114
    $region4: #{tpu_custom_call.1} parent=1 // loop_header_branch
      %19 = sbr.rel (%p17) target = $region8
    $region5: #{tpu_custom_call.1} parent=1 // loop_body
      %s21 = ssub.s32 %s16, 1
      %s22 = ssub.s32 %s16, 2
      %s29 = sadd.s32 1, %s24
      %p30 = scmp.ge.s32.totalorder %s29, 4
      %s31 = scalar_select %p30, 0, %s29
      %s32 = sadd.s32 1, %s23
      %s33 = scalar_select %p30, %s32, %s23
      %p34 = scmp.ge.s32.totalorder %s33, 1
      %s35 = scalar_select %p34, 0, %s33
      %s36 = ssub.s32 %s24, %s31
      %s37 = ssub.s32 %s23, %s35
      %s38 = sor.u32 %s36, %s37
      %p39 = scmp.eq.s32.totalorder %s38, 0
      %s41 = sadd.s32 %s40, 1
      %s42 = scalar_select %p39, %s40, %s41
      %p45 = pneg %p39
      %p46 = scmp.eq.s32.totalorder %s16, 3
      %p47 = por %p45, %p46
      %p48 = scmp.ne.s32.totalorder %s40, %s43
      %p49 = scmp.eq.s32.totalorder %s16, 0
      %p50 = por %p48, %p49
      %p51 = scmp.ne.s32.totalorder %s40, %s43
      %p52 = scmp.eq.s32.totalorder %s21, 3
      %p53 = por %p51, %p52
      %p54 = scmp.ne.s32.totalorder %s43, %s44
      %p55 = scmp.eq.s32.totalorder %s21, 0
      %p56 = por %p54, %p55
      %p57 = scmp.ne.s32.totalorder %s43, %s44
      %p58 = scmp.eq.s32.totalorder %s22, 3
      %p59 = por %p57, %p58
      %p61 = scmp.ne.s32.totalorder %s44, %s60
      %p62 = scmp.eq.s32.totalorder %s22, 0
      %p63 = por %p61, %p62
      %s65 = sadd.s32 %s64, 1
      %p68 = scmp.eq.s32.totalorder %s16, 3
      %p69 = scmp.ne.s32.totalorder %s64, %s66
      %p70 = scmp.eq.s32.totalorder %s16, 0
      %p71 = por %p69, %p70
      %p72 = scmp.ne.s32.totalorder %s64, %s66
      %p73 = scmp.eq.s32.totalorder %s21, 3
      %p74 = por %p72, %p73
      %p75 = scmp.ne.s32.totalorder %s66, %s67
      %p76 = scmp.eq.s32.totalorder %s21, 0
      %p77 = por %p75, %p76
      %p78 = scmp.ne.s32.totalorder %s66, %s67
      %p79 = scmp.eq.s32.totalorder %s22, 3
      %p80 = por %p78, %p79
      %p82 = scmp.ne.s32.totalorder %s67, %s81
      %p83 = scmp.eq.s32.totalorder %s22, 0
      %p84 = por %p82, %p83
      %s86 = sadd.s32 %s85, 1
      %p89 = scmp.eq.s32.totalorder %s16, 3
      %p90 = scmp.ne.s32.totalorder %s85, %s87
      %p91 = scmp.eq.s32.totalorder %s16, 0
      %p92 = por %p90, %p91
      %p93 = scmp.ne.s32.totalorder %s85, %s87
      %p94 = scmp.eq.s32.totalorder %s21, 3
      %p95 = por %p93, %p94
      %p96 = scmp.ne.s32.totalorder %s87, %s88
      %p97 = scmp.eq.s32.totalorder %s21, 0
      %p98 = por %p96, %p97
      %p99 = scmp.ne.s32.totalorder %s87, %s88
      %p100 = scmp.eq.s32.totalorder %s22, 3
      %p101 = por %p99, %p100
      %p103 = scmp.ne.s32.totalorder %s88, %s102
      %p104 = scmp.eq.s32.totalorder %s22, 0
      %p105 = por %p103, %p104
      %s106 = ssub.s32 %s24, %s31
      %s107 = ssub.s32 %s23, %s35
      %s108 = sor.u32 %s106, %s107
      %p109 = scmp.eq.s32.totalorder %s108, 0
      %s111 = sadd.s32 %s110, 1
      %s112 = scalar_select %p109, %s110, %s111
      %p115 = pneg %p109
      %p116 = scmp.eq.s32.totalorder %s16, 3
      %p117 = por %p115, %p116
      %p118 = scmp.ne.s32.totalorder %s110, %s113
      %p119 = scmp.eq.s32.totalorder %s16, 0
      %p120 = por %p118, %p119
      %p121 = scmp.ne.s32.totalorder %s110, %s113
      %p122 = scmp.eq.s32.totalorder %s21, 3
      %p123 = por %p121, %p122
      %p124 = scmp.ne.s32.totalorder %s113, %s114
      %p125 = scmp.eq.s32.totalorder %s21, 0
      %p126 = por %p124, %p125
      %p127 = scmp.ne.s32.totalorder %s113, %s114
      %p128 = scmp.eq.s32.totalorder %s22, 3
      %p129 = por %p127, %p128
      %p131 = scmp.ne.s32.totalorder %s114, %s130
      %p132 = scmp.eq.s32.totalorder %s22, 0
      %p133 = por %p131, %p132
      %p134 = scmp.le.s32.totalorder 1, %s16
      %p135 = scmp.lt.s32.totalorder %s16, 5
      %p136 = pnand %p134, %p135
      %p137 = pneg %p136
      // Predicated region
      $region9: #{tpu_custom_call.1} parent=5 // pred_check
        _
      $region10: #{tpu_custom_call.1} parent=5 // pred_check_branch
        %139 = sbr.rel (%p136) target = $region12
      $region11: #{tpu_custom_call.1} parent=5 // pred_region
        %s140 = ssub.s32 %s16, 1
        // Predicated region
        $region13: #{tpu_custom_call.1} parent=11 // pred_check
          %p141 = pneg %p77
        $region14: #{tpu_custom_call.1} parent=11 // pred_check_branch
          %143 = sbr.rel (%p141) target = $region16
        $region15: #{tpu_custom_call.1} parent=11 // pred_region
          %s145 = ssub.s32 256, 256
          %146 = vsyncadd [#allocation6], %s145
          %s147 = sshll.u32 [#allocation5], 4
          %s148 = int_to_ptr.vmem [resolvable:$true] %s147
          %153 = dma.hbm_to_vmem [thread:$0]  %s1, 256, %s148, [#allocation6], 64, 64, 4
        $region16: #{tpu_custom_call.1} parent=11 // pred_fallthru
          _
        // Predicated region
        $region17: #{tpu_custom_call.1} parent=11 // pred_check
          %p154 = pneg %p98
        $region18: #{tpu_custom_call.1} parent=11 // pred_check_branch
          %156 = sbr.rel (%p154) target = $region20
        $region19: #{tpu_custom_call.1} parent=11 // pred_region
          _
        $region20: #{tpu_custom_call.1} parent=11 // pred_fallthru
          _
      $region12: #{tpu_custom_call.1} parent=5 // pred_fallthru
        _
      %p157 = scmp.lt.s32.totalorder %s16, 4
      // Predicated region
      $region21: #{tpu_custom_call.1} parent=5 // pred_check
        %p158 = pneg %p157
      $region22: #{tpu_custom_call.1} parent=5 // pred_check_branch
        %160 = sbr.rel (%p158) target = $region24
      $region23: #{tpu_custom_call.1} parent=5 // pred_region
        // Predicated region
        $region25: #{tpu_custom_call.1} parent=23 // pred_check
          %p161 = pneg %p50
        $region26: #{tpu_custom_call.1} parent=23 // pred_check_branch
          %163 = sbr.rel (%p161) target = $region28
        $region27: #{tpu_custom_call.1} parent=23 // pred_region
          %s164 = sand.u32 %s40, 1
          %s165 = scalar_lea.sflag [#allocation3], %s164
          %s166 = sand.u32 %s40, 1
          %s167 = smul.addr %s166, 4
          %s168 = scalar_lea.vmem [#allocation2], %s167
          %s170 = ssub.s32 64, 64
          %171 = vsyncadd %s165, %s170
          %s172 = sadd.s32 %s23, %s24
          %s173 = smul.addr %s172, 64
          %s174 = scalar_lea.hbm %s0, %s173
          %s176 = sshll.u32 %s168, 4
          %s177 = int_to_ptr.vmem [resolvable:$true] %s176
          %179 = dma.hbm_to_vmem [thread:$0]  %s174, 64, %s177, %s165
        $region28: #{tpu_custom_call.1} parent=23 // pred_fallthru
          _
      $region24: #{tpu_custom_call.1} parent=5 // pred_fallthru
        _
      %p180 = scmp.le.s32.totalorder 1, %s16
      %p181 = scmp.lt.s32.totalorder %s16, 5
      %p182 = pnand %p180, %p181
      %p183 = pneg %p182
      // Predicated region
      $region29: #{tpu_custom_call.1} parent=5 // pred_check
        _
      $region30: #{tpu_custom_call.1} parent=5 // pred_check_branch
        %185 = sbr.rel (%p182) target = $region32
      $region31: #{tpu_custom_call.1} parent=5 // pred_region
        %s186 = ssub.s32 %s16, 1
        %s187 = sand.u32 %s43, 1
        %s188 = scalar_lea.sflag [#allocation3], %s187
        %s189 = sand.u32 %s43, 1
        %s190 = smul.addr %s189, 4
        %s191 = scalar_lea.vmem [#allocation2], %s190
        // Predicated region
        $region33: #{tpu_custom_call.1} parent=31 // pred_check
          %p192 = pneg %p56
        $region34: #{tpu_custom_call.1} parent=31 // pred_check_branch
          %194 = sbr.rel (%p192) target = $region36
        $region35: #{tpu_custom_call.1} parent=31 // pred_region
          %195 = dma.done %s188, 64
        $region36: #{tpu_custom_call.1} parent=31 // pred_fallthru
          _
        // Predicated region
        $region37: #{tpu_custom_call.1} parent=31 // pred_check
          %p196 = pneg %p77
        $region38: #{tpu_custom_call.1} parent=31 // pred_check_branch
          %198 = sbr.rel (%p196) target = $region40
        $region39: #{tpu_custom_call.1} parent=31 // pred_region
          %199 = dma.done [#allocation6], 256
        $region40: #{tpu_custom_call.1} parent=31 // pred_fallthru
          _
        %s200 = sand.u32 %s43, 1
        %s201 = scalar_lea.sflag [#allocation3], %s200
        %s202 = sand.u32 %s43, 1
        %s203 = smul.addr %s202, 4
        %s204 = scalar_lea.vmem [#allocation2], %s203
        %p205 = pneg %p56
        %p206 = pneg %p53
        %p207 = pneg %p77
        %p208 = pneg %p74
        %p209 = pneg %p98
        %p210 = pneg %p95
        %p211 = pneg %p126
        %p212 = pneg %p123
        %s213 = sand.u32 %s113, 1
        %s214 = scalar_lea.sflag [#allocation4], %s213
        %s215 = sand.u32 %s113, 1
        %s216 = smul.addr %s215, 8
        %s217 = scalar_lea.vmem [#allocation7], %s216
        %v219 = vld [vmem:[%s191] sm:$0xf]
        %v220 = vld [vmem:[#allocation5] sm:$0xf]
        %v221 = vld [vmem:[#allocation5 + $0x4] sm:$0xf]
        %v222 = vld [vmem:[#allocation5 + $0x8] sm:$0xf]
        %v223 = vld [vmem:[#allocation5 + $0xc] sm:$0xf]
        %v224 = vld [vmem:[%s2] sm:$0x1]
        %v226 = vlaneseq
        %v227 = vshrl.u32 %v226, 7
        %v228 = vsub.s32 0, %v227
        %v229 = vrot.slane %v224, %v228
        %v235 = vunpack.c.l.b16 %v220
        %v236 = vunpack.c.l.b16 %v221
        %v237 = vunpack.c.l.b16 %v222
        %v238 = vunpack.c.l.b16 %v223
        %v239 = vpack.c.b16 %v236, %v235
        %v240 = vpack.c.b16 %v238, %v237
        %vm243 = vcmask 261120
        %v245 = vsel %vm243, %v219, 0
        %247 = vmatprep.subr.bf16.mxu0 0
        %248 = vmatpush1.bf16.msra.mxu0 %v239
        %249 = vmatprep.subr.bf16.mxu0 0
        %250 = vmatpush1.bf16.msra.mxu0 %v240
        %251 = vmatprep.subr.bf16.mxu0 0
        %252 = vmatpush1.bf16.msra.mxu0 0
        %253 = vmatprep.subr.bf16.mxu0 0
        %254 = vmatpush1.bf16.msra.mxu0 0
        %255 = vmatprep.subr.bf16.mxu0 0
        %256 = vmatpush1.bf16.msra.mxu0 0
        %257 = vmatprep.subr.bf16.mxu0 0
        %258 = vmatpush1.bf16.msra.mxu0 0
        %259 = vmatprep.subr.bf16.mxu0 0
        %260 = vmatpush1.bf16.msra.mxu0 0
        %261 = vmatprep.subr.bf16.mxu0 0
        %262 = vmatpush1.bf16.msra.mxu0 0
        %263 = vmatprep.subr.bf16.mxu0 0
        %264 = vmatpush1.bf16.msra.mxu0 0
        %265 = vmatprep.subr.bf16.mxu0 0
        %266 = vmatpush1.bf16.msra.mxu0 0
        %267 = vmatprep.subr.bf16.mxu0 0
        %268 = vmatpush1.bf16.msra.mxu0 0
        %269 = vmatprep.subr.bf16.mxu0 0
        %270 = vmatpush1.bf16.msra.mxu0 0
        %271 = vmatprep.subr.bf16.mxu0 0
        %272 = vmatpush1.bf16.msra.mxu0 0
        %273 = vmatprep.subr.bf16.mxu0 0
        %274 = vmatpush1.bf16.msra.mxu0 0
        %275 = vmatprep.subr.bf16.mxu0 0
        %276 = vmatpush1.bf16.msra.mxu0 0
        %277 = vmatprep.subr.bf16.mxu0 0
        %278 = vmatpush1.bf16.msra.mxu0 0
        %279 = vmatprep.mubr.bf16.mxu0 0
        %280 = vmatmul.mubr.bf16.gmra.mrb[0].mxu0 %v245
        %v281 = vpop.f32.mrb[0].mxu0
        %v282 = vadd.f32 %v229, %v281
        %v283 = vpop.f32.mrb[0].mxu0
        %v284 = vpop.f32.mrb[0].mxu0
        %v285 = vpop.f32.mrb[0].mxu0
        %286 = vdwg.mxu0
        %287 = vst [vmem:[%s217] sm:$0xff] %v282
        %s288 = sand.u32 %s113, 1
        %s289 = scalar_lea.sflag [#allocation4], %s288
        %s290 = sand.u32 %s113, 1
        %s291 = smul.addr %s290, 8
        %s292 = scalar_lea.vmem [#allocation7], %s291
        // Predicated region
        $region41: #{tpu_custom_call.1} parent=31 // pred_check
          %p293 = pneg %p123
        $region42: #{tpu_custom_call.1} parent=31 // pred_check_branch
          %295 = sbr.rel (%p293) target = $region44
        $region43: #{tpu_custom_call.1} parent=31 // pred_region
          %s297 = ssub.s32 128, 128
          %298 = vsyncadd %s289, %s297
          %s299 = sadd.s32 %s25, %s26
          %s300 = smul.addr %s299, 128
          %s301 = scalar_lea.hbm %s3, %s300
          %s303 = sshll.u32 %s292, 4
          %s304 = int_to_ptr.vmem [resolvable:$true] %s303
          %306 = dma.vmem_to_hbm [thread:$0]  %s304, 128, %s301, %s289
        $region44: #{tpu_custom_call.1} parent=31 // pred_fallthru
          _
      $region32: #{tpu_custom_call.1} parent=5 // pred_fallthru
        _
      %p307 = scmp.le.s32.totalorder 2, %s16
      // Predicated region
      $region45: #{tpu_custom_call.1} parent=5 // pred_check
        %p308 = pneg %p307
      $region46: #{tpu_custom_call.1} parent=5 // pred_check_branch
        %310 = sbr.rel (%p308) target = $region48
      $region47: #{tpu_custom_call.1} parent=5 // pred_region
        %s311 = ssub.s32 %s16, 2
        // Predicated region
        $region49: #{tpu_custom_call.1} parent=47 // pred_check
          %p312 = pneg %p129
        $region50: #{tpu_custom_call.1} parent=47 // pred_check_branch
          %314 = sbr.rel (%p312) target = $region52
        $region51: #{tpu_custom_call.1} parent=47 // pred_region
          %s315 = sand.u32 %s114, 1
          %s316 = scalar_lea.sflag [#allocation4], %s315
          %s317 = sand.u32 %s114, 1
          %s318 = smul.addr %s317, 8
          %s319 = scalar_lea.vmem [#allocation7], %s318
          %320 = dma.done %s316, 128
        $region52: #{tpu_custom_call.1} parent=47 // pred_fallthru
          _
      $region48: #{tpu_custom_call.1} parent=5 // pred_fallthru
        _
    $region6: #{tpu_custom_call.1} parent=1 // loop_footer
      %s20 = sadd.s32 1, %s16
    $region7: #{tpu_custom_call.1} parent=1 // loop_footer_branch
      %15 = sbr.rel target = $region3
    $region8: #{tpu_custom_call.1} parent=1 // loop_exit
      _
    %321 = vsyncpa [#allocation3], 1
    %s322 = scalar_lea.sflag [#allocation3], 1
    %323 = vsyncpa %s322, 1
    %324 = vsyncpa [#allocation6], 1
    %325 = vsyncpa [#allocation4], 1
    %s326 = scalar_lea.sflag [#allocation4], 1
    %327 = vsyncpa %s326, 1

</llo_original>
